<compile_context>
chip_gen: v5e
topology: v5e:2x2
jax: 0.10.0
libtpu: 0.0.40
codegen_flags: <defaults>
</compile_context>

<pallas_src>
import functools

import jax
import jax.numpy as jnp
from jax.experimental import pallas as pl
from jax.experimental.pallas import tpu as pltpu

LN_EPS = 1e-5          # torch.nn.LayerNorm default
LEAKY_SLOPE = 0.01     # torch.nn.LeakyReLU default

_WEIGHT_NAMES = ("w1", "b1", "g1", "be1", "w2", "b2", "g2", "be2", "w3", "b3")


def _round_up(n, m):
    return ((n + m - 1) // m) * m


@functools.lru_cache(maxsize=1)
def _physical_vmem_bytes():
    try:
        return int(pltpu.get_tpu_info().vmem_capacity_bytes)
    except Exception:
        return 64 * 1024 * 1024   # conservative: v7x per-TensorCore VMEM


# ---------------------------------------------------------------------------
# One-time parameter preparation (outside the per-call path)
# ---------------------------------------------------------------------------
def prepare_params(params):
    """One-time packing of BweHead2 parameters for the fused kernel.

    * hidden / output feature axes are zero-padded to multiples of 128 lanes,
      matmul weights are cast to bf16 (f32 accumulation on the MXU), biases
      and LayerNorm affine params stay f32;
    * done once, so the forward pass pays no per-call pad/convert passes.

    INVARIANT the kernel relies on: every padded lane of every prepared array
    is exactly zero (LayerNorm statistics and the residual path assume it).
    Feeding pre-padded arrays with nonzero padding silently corrupts the
    output — always go through this function.
    """
    d_in, h = params["w1"].shape
    d_out = params["w3"].shape[1]
    h_pad = _round_up(h, 128)
    d_out_pad = _round_up(d_out, 128)

    def pad2(a, rows, cols, dtype=jnp.float32):
        a = jnp.asarray(a, jnp.float32)
        a = jnp.pad(a, ((0, rows - a.shape[0]), (0, cols - a.shape[1])))
        return a.astype(dtype)

    return {
        "w1": pad2(params["w1"], d_in, h_pad, jnp.bfloat16),
        "b1": pad2(params["b1"], 1, h_pad),
        "g1": pad2(params["g1"], 1, h_pad),
        "be1": pad2(params["be1"], 1, h_pad),
        "w2": pad2(params["w2"], h_pad, h_pad, jnp.bfloat16),
        "b2": pad2(params["b2"], 1, h_pad),
        "g2": pad2(params["g2"], 1, h_pad),
        "be2": pad2(params["be2"], 1, h_pad),
        "w3": pad2(params["w3"], h_pad, d_out_pad, jnp.bfloat16),
        "b3": pad2(params["b3"], 1, d_out_pad),
        "h": h, "d_in": d_in, "d_out": d_out,
    }


# ---------------------------------------------------------------------------
# Fused kernel
# ---------------------------------------------------------------------------
def _make_kernel(h_real, d_out, scale):
    """Build the fused kernel; h_real / d_out / scale are compile-time consts."""
    inv_h = 1.0 / float(h_real)

    def leaky(v):
        # LeakyReLU(0.01) == max(v, 0.01*v) for slope in (0, 1): vmul + vmax.
        return jnp.maximum(v, LEAKY_SLOPE * v)

    def layer_norm(h, gamma, beta):
        # Padded lanes of `h` are exactly zero (zero-padded weights/biases),
        # so lane-axis sums equal sums over the real h_real features.  Biased
        # variance via E[x^2] - mean^2 needs no mask/select and no second
        # centered pass over the (tm, H_pad) tile (VPU is the hot unit).
        # gamma/beta are zero in padded lanes, so padded LN outputs stay zero.
        mean = jnp.sum(h, axis=-1, keepdims=True) * inv_h
        ex2 = jnp.sum(h * h, axis=-1, keepdims=True) * inv_h
        var = jnp.maximum(ex2 - mean * mean, 0.0)
        inv = jax.lax.rsqrt(var + LN_EPS)
        return (h - mean) * inv * gamma + beta

    def kernel(x_ref,
               w1_ref, b1_ref, g1_ref, be1_ref,    # fc_head1 + layer_norm
               w2_ref, b2_ref, g2_ref, be2_ref,    # residual block
               w3_ref, b3_ref,                     # fc_head2
               o_ref):
        # fc_head1 -> LayerNorm -> LeakyReLU.  x is cast to bf16 in-kernel so
        # HBM only reads the original f32 once (no standalone cast pass).
        x = x_ref[...].astype(w1_ref.dtype)
        h = jnp.dot(x, w1_ref[...],
                    preferred_element_type=jnp.float32) + b1_ref[...]
        h = leaky(layer_norm(h, g1_ref[...], be1_ref[...]))

        # ResidualBlock: h + LeakyReLU(LayerNorm(Linear(h)))
        h2 = jnp.dot(h.astype(w2_ref.dtype), w2_ref[...],
                     preferred_element_type=jnp.float32) + b2_ref[...]
        h2 = leaky(layer_norm(h2, g2_ref[...], be2_ref[...])) + h

        # fc_head2 -> LeakyReLU -> tanh * (max_action * 1e6)
        out = jnp.dot(h2.astype(w3_ref.dtype), w3_ref[...],
                      preferred_element_type=jnp.float32) + b3_ref[...]
        out = jnp.tanh(leaky(out)) * scale
        # Store only the real output features: the output array is (B, D_out),
        # so no padded lanes are ever written to (or re-read from) HBM.
        o_ref[...] = out[:, :d_out].astype(o_ref.dtype)

    return kernel


@functools.partial(
    jax.jit,
    static_argnames=("h_real", "d_out", "scale", "tm", "vmem_limit",
                     "single_buffer_weights"))
def _forward(x, w1, b1, g1, be1, w2, b2, g2, be2, w3, b3, *,
             h_real, d_out, scale, tm, vmem_limit, single_buffer_weights):
    weights = (w1, b1, g1, be1, w2, b2, g2, be2, w3, b3)
    batch, d_in = x.shape
    grid = (pl.cdiv(batch, tm),)

    # Weights are grid-invariant: a single VMEM buffer is enough (the default
    # double-buffering would waste VMEM — matters most on v7x's 64 MiB).
    w_kwargs = ({"pipeline_mode": pl.Buffered(1)} if single_buffer_weights
                else {})
    w_specs = [pl.BlockSpec(a.shape, lambda i: (0, 0), **w_kwargs)
               for a in weights]

    return pl.pallas_call(
        _make_kernel(h_real, d_out, scale),
        out_shape=jax.ShapeDtypeStruct((batch, d_out), jnp.float32),
        grid=grid,
        in_specs=[pl.BlockSpec((tm, d_in), lambda i: (i, 0))] + w_specs,
        out_specs=pl.BlockSpec((tm, d_out), lambda i: (i, 0)),
        compiler_params=pltpu.CompilerParams(
            dimension_semantics=("parallel",),
            vmem_limit_bytes=vmem_limit),
    )(x, *weights)


# ---------------------------------------------------------------------------
# Wrapper
# ---------------------------------------------------------------------------
_SINGLE_BUFFER_WEIGHTS_OK = None   # resolved by a one-time probe on first call


def _pick_tm(batch, block_m):
    """Batch tile: multiple of 8 sublanes, capped at block_m, and chosen so
    the batch grid has >= 2 steps whenever batch > 8 (v7x megacore)."""
    b8 = _round_up(batch, 8)
    if b8 <= 8:
        return b8
    return max(8, min(block_m, _round_up((batch + 1) // 2, 8)))


def bwe_head2_forward(x, prepared, max_action, *, block_m=512):
    """Fused BweHead2 forward.  `prepared` must come from prepare_params().

    block_m: max batch-tile rows.  512 is a good cross-generation default
    (v5e: keep <= 512 to bound f32 spill against its single vst slot; v6e/v7x
    can take 1024 when VMEM allows).
    """
    global _SINGLE_BUFFER_WEIGHTS_OK

    batch = x.shape[0]
    d_in, h_pad = prepared["w1"].shape
    d_out = prepared["d_out"]
    tm = _pick_tm(batch, block_m)

    weight_bytes = sum(prepared[n].size * prepared[n].dtype.itemsize
                       for n in _WEIGHT_NAMES)
    # VMEM budget: weights (worst case double-buffered), double-buffered
    # x / out tiles, plus headroom for the f32 (tm, H_pad) live intermediates
    # and spill scratch.  Capped at 90% of physical VMEM for this generation.
    est = (2 * weight_bytes
           + 2 * tm * d_in * 4
           + 2 * tm * d_out * 4
           + 8 * tm * h_pad * 4)
    vmem_limit = int(min(max(int(est * 1.25), 32 * 1024 * 1024),
                         int(_physical_vmem_bytes() * 0.9)))

    kwargs = dict(h_real=prepared["h"], d_out=d_out,
                  scale=float(max_action) * 1000000.0,
                  tm=tm, vmem_limit=vmem_limit)
    args = (x,) + tuple(prepared[n] for n in _WEIGHT_NAMES)

    if _SINGLE_BUFFER_WEIGHTS_OK is None:
        # Probe pl.Buffered(1) support once; fall back to the default
        # (double-buffered) weight specs if this Pallas build rejects it.
        try:
            out = _forward(*args, single_buffer_weights=True, **kwargs)
            jax.block_until_ready(out)
            _SINGLE_BUFFER_WEIGHTS_OK = True
            return out
        except Exception:
            _SINGLE_BUFFER_WEIGHTS_OK = False
    return _forward(*args, single_buffer_weights=_SINGLE_BUFFER_WEIGHTS_OK,
                    **kwargs)


# ---------------------------------------------------------------------------
# Test harness
# ---------------------------------------------------------------------------
def init_params(key, input_dim, hidden_dim, output_dim):
    """Deterministic synthetic parameters (shapes match the PyTorch module)."""
    ks = jax.random.split(key, 6)

    def linear(kw, kb, fan_in, fan_out):
        bound = 1.0 / jnp.sqrt(fan_in)
        w = jax.random.uniform(kw, (fan_in, fan_out), jnp.float32, -bound, bound)
        b = jax.random.uniform(kb, (1, fan_out), jnp.float32, -bound, bound)
        return w, b

    w1, b1 = linear(ks[0], ks[1], input_dim, hidden_dim)
    w2, b2 = linear(ks[2], ks[3], hidden_dim, hidden_dim)
    w3, b3 = linear(ks[4], ks[5], hidden_dim, output_dim)

    return {
        "w1": w1, "b1": b1,
        "g1": jnp.ones((1, hidden_dim), jnp.float32),
        "be1": jnp.zeros((1, hidden_dim), jnp.float32),
        "w2": w2, "b2": b2,
        "g2": jnp.ones((1, hidden_dim), jnp.float32),
        "be2": jnp.zeros((1, hidden_dim), jnp.float32),
        "w3": w3, "b3": b3,
    }


def reference_forward(x, p, max_action):
    """Plain-JAX reference mirroring the PyTorch module.

    Matmul operands go through the same bf16 quantization the kernel applies
    to its HBM-facing operands; all other math is f32 (exact module
    semantics, standard centered-variance LayerNorm)."""
    q = lambda a: a.astype(jnp.bfloat16).astype(jnp.float32)
    leaky = lambda h: jnp.maximum(h, LEAKY_SLOPE * h)

    def ln(h, gamma, beta):
        mean = jnp.mean(h, axis=-1, keepdims=True)
        c = h - mean
        var = jnp.mean(c * c, axis=-1, keepdims=True)
        return c * jax.lax.rsqrt(var + LN_EPS) * gamma + beta

    h = q(x) @ q(p["w1"]) + p["b1"]
    h = leaky(ln(h, p["g1"], p["be1"]))
    h2 = q(h) @ q(p["w2"]) + p["b2"]
    h2 = leaky(ln(h2, p["g2"], p["be2"])) + h
    out = q(h2) @ q(p["w3"]) + p["b3"]
    out = leaky(out)
    return jnp.tanh(out) * max_action * 1000000.0


if __name__ == "__main__":
    key = jax.random.PRNGKey(0)
    k_x, k_p = jax.random.split(key)

    batch, input_dim, hidden_dim, output_dim = 8, 32, 32, 8
    max_action = 1.0

    x = jax.random.normal(k_x, (batch, input_dim), jnp.float32)
    params = init_params(k_p, input_dim, hidden_dim, output_dim)
    prepared = prepare_params(params)   # one-time pad + bf16 cast

    out = bwe_head2_forward(x, prepared, max_action)
    out = jax.block_until_ready(out)

    ref = reference_forward(x, params, max_action)
    assert out.shape == (batch, output_dim), out.shape
    # tanh(.) * 1e6 amplifies f32 rounding differences (padded-lane reduction
    # order, E[x^2]-mean^2 variance form vs centered); atol=64 on a +-1e6
    # output range is a 6.4e-5 relative tolerance.
    max_err = float(jnp.max(jnp.abs(out - ref)))
    assert jnp.allclose(out, ref, rtol=2e-3, atol=64.0), (
        f"mismatch vs reference (max abs err {max_err})")

    print("KERNEL_OK")
</pallas_src>

<mosaic_0001>
module attributes {stable_mosaic.version = 11 : i64} {
  func.func @kernel(%arg0: i32, %arg1: memref<8x32xf32, #tpu.memory_space<vmem>>, %arg2: memref<32x128xbf16, #tpu.memory_space<vmem>>, %arg3: memref<1x128xf32, #tpu.memory_space<vmem>>, %arg4: memref<1x128xf32, #tpu.memory_space<vmem>>, %arg5: memref<1x128xf32, #tpu.memory_space<vmem>>, %arg6: memref<128x128xbf16, #tpu.memory_space<vmem>>, %arg7: memref<1x128xf32, #tpu.memory_space<vmem>>, %arg8: memref<1x128xf32, #tpu.memory_space<vmem>>, %arg9: memref<1x128xf32, #tpu.memory_space<vmem>>, %arg10: memref<128x128xbf16, #tpu.memory_space<vmem>>, %arg11: memref<1x128xf32, #tpu.memory_space<vmem>>, %arg12: memref<8x8xf32, #tpu.memory_space<vmem>>) attributes {dimension_semantics = [#tpu.dimension_semantics<parallel>], iteration_bounds = array<i64: 1>, scalar_prefetch = 0 : i64, scratch_operands = 0 : i64, tpu.core_type = #tpu.core_type<tc>, window_params = [{transform_indices = @transform_0, window_bounds = array<i64: 8, 32>}, {pipeline_mode = #tpu.pipeline_mode<synchronous>, transform_indices = @transform_1, window_bounds = array<i64: 32, 128>}, {pipeline_mode = #tpu.pipeline_mode<synchronous>, transform_indices = @transform_2, window_bounds = array<i64: 1, 128>}, {pipeline_mode = #tpu.pipeline_mode<synchronous>, transform_indices = @transform_3, window_bounds = array<i64: 1, 128>}, {pipeline_mode = #tpu.pipeline_mode<synchronous>, transform_indices = @transform_4, window_bounds = array<i64: 1, 128>}, {pipeline_mode = #tpu.pipeline_mode<synchronous>, transform_indices = @transform_5, window_bounds = array<i64: 128, 128>}, {pipeline_mode = #tpu.pipeline_mode<synchronous>, transform_indices = @transform_6, window_bounds = array<i64: 1, 128>}, {pipeline_mode = #tpu.pipeline_mode<synchronous>, transform_indices = @transform_7, window_bounds = array<i64: 1, 128>}, {pipeline_mode = #tpu.pipeline_mode<synchronous>, transform_indices = @transform_8, window_bounds = array<i64: 1, 128>}, {pipeline_mode = #tpu.pipeline_mode<synchronous>, transform_indices = @transform_9, window_bounds = array<i64: 128, 128>}, {pipeline_mode = #tpu.pipeline_mode<synchronous>, transform_indices = @transform_10, window_bounds = array<i64: 1, 128>}, {transform_indices = @transform_11, window_bounds = array<i64: 8, 8>}]} {
    %c0 = arith.constant 0 : index
    %c0_0 = arith.constant 0 : index
    %0 = vector.load %arg1[%c0, %c0_0] : memref<8x32xf32, #tpu.memory_space<vmem>>, vector<8x32xf32>
    %1 = arith.truncf %0 : vector<8x32xf32> to vector<8x32xbf16>
    %c0_1 = arith.constant 0 : index
    %c0_2 = arith.constant 0 : index
    %2 = vector.load %arg2[%c0_1, %c0_2] : memref<32x128xbf16, #tpu.memory_space<vmem>>, vector<32x128xbf16>
    %cst = arith.constant dense<0.000000e+00> : vector<8x128xf32>
    %3 = tpu.matmul %1, %2, %cst {dimension_numbers = #tpu.dot_dimension_numbers<[1], [0], [0], [1], [0, 0, 1, 1], [], []>} : vector<8x32xbf16>, vector<32x128xbf16>, vector<8x128xf32> -> vector<8x128xf32>
    %c0_3 = arith.constant 0 : index
    %c0_4 = arith.constant 0 : index
    %4 = vector.load %arg3[%c0_3, %c0_4] : memref<1x128xf32, #tpu.memory_space<vmem>>, vector<1x128xf32>
    %5 = vector.broadcast %4 : vector<1x128xf32> to vector<8x128xf32>
    %6 = arith.addf %3, %5 : vector<8x128xf32>
    %c0_5 = arith.constant 0 : index
    %c0_6 = arith.constant 0 : index
    %7 = vector.load %arg4[%c0_5, %c0_6] : memref<1x128xf32, #tpu.memory_space<vmem>>, vector<1x128xf32>
    %c0_7 = arith.constant 0 : index
    %c0_8 = arith.constant 0 : index
    %8 = vector.load %arg5[%c0_7, %c0_8] : memref<1x128xf32, #tpu.memory_space<vmem>>, vector<1x128xf32>
    %cst_9 = arith.constant dense<0.000000e+00> : vector<8xf32>
    %9 = vector.multi_reduction <add>, %6, %cst_9 [1] : vector<8x128xf32> to vector<8xf32>
    %10 = vector.shape_cast %9 : vector<8xf32> to vector<8x1xf32>
    %cst_10 = arith.constant 3.125000e-02 : f32
    %11 = vector.broadcast %cst_10 : f32 to vector<8x1xf32>
    %12 = arith.mulf %10, %11 : vector<8x1xf32>
    %13 = arith.mulf %6, %6 : vector<8x128xf32>
    %cst_11 = arith.constant dense<0.000000e+00> : vector<8xf32>
    %14 = vector.multi_reduction <add>, %13, %cst_11 [1] : vector<8x128xf32> to vector<8xf32>
    %15 = vector.shape_cast %14 : vector<8xf32> to vector<8x1xf32>
    %cst_12 = arith.constant 3.125000e-02 : f32
    %16 = vector.broadcast %cst_12 : f32 to vector<8x1xf32>
    %17 = arith.mulf %15, %16 : vector<8x1xf32>
    %18 = arith.mulf %12, %12 : vector<8x1xf32>
    %19 = arith.subf %17, %18 : vector<8x1xf32>
    %cst_13 = arith.constant 0.000000e+00 : f32
    %20 = vector.broadcast %cst_13 : f32 to vector<8x1xf32>
    %21 = arith.maximumf %19, %20 : vector<8x1xf32>
    %cst_14 = arith.constant 9.99999974E-6 : f32
    %22 = vector.broadcast %cst_14 : f32 to vector<8x1xf32>
    %23 = arith.addf %21, %22 : vector<8x1xf32>
    %24 = math.rsqrt %23 : vector<8x1xf32>
    %25 = vector.broadcast %12 : vector<8x1xf32> to vector<8x128xf32>
    %26 = arith.subf %6, %25 : vector<8x128xf32>
    %27 = vector.broadcast %24 : vector<8x1xf32> to vector<8x128xf32>
    %28 = arith.mulf %26, %27 : vector<8x128xf32>
    %29 = vector.broadcast %7 : vector<1x128xf32> to vector<8x128xf32>
    %30 = arith.mulf %28, %29 : vector<8x128xf32>
    %31 = vector.broadcast %8 : vector<1x128xf32> to vector<8x128xf32>
    %32 = arith.addf %30, %31 : vector<8x128xf32>
    %cst_15 = arith.constant 0.00999999977 : f32
    %33 = vector.broadcast %cst_15 : f32 to vector<8x128xf32>
    %34 = arith.mulf %33, %32 : vector<8x128xf32>
    %35 = arith.maximumf %32, %34 : vector<8x128xf32>
    %36 = arith.truncf %35 : vector<8x128xf32> to vector<8x128xbf16>
    %c0_16 = arith.constant 0 : index
    %c0_17 = arith.constant 0 : index
    %37 = vector.load %arg6[%c0_16, %c0_17] : memref<128x128xbf16, #tpu.memory_space<vmem>>, vector<128x128xbf16>
    %cst_18 = arith.constant dense<0.000000e+00> : vector<8x128xf32>
    %38 = tpu.matmul %36, %37, %cst_18 {dimension_numbers = #tpu.dot_dimension_numbers<[1], [0], [0], [1], [0, 0, 1, 1], [], []>} : vector<8x128xbf16>, vector<128x128xbf16>, vector<8x128xf32> -> vector<8x128xf32>
    %c0_19 = arith.constant 0 : index
    %c0_20 = arith.constant 0 : index
    %39 = vector.load %arg7[%c0_19, %c0_20] : memref<1x128xf32, #tpu.memory_space<vmem>>, vector<1x128xf32>
    %40 = vector.broadcast %39 : vector<1x128xf32> to vector<8x128xf32>
    %41 = arith.addf %38, %40 : vector<8x128xf32>
    %c0_21 = arith.constant 0 : index
    %c0_22 = arith.constant 0 : index
    %42 = vector.load %arg8[%c0_21, %c0_22] : memref<1x128xf32, #tpu.memory_space<vmem>>, vector<1x128xf32>
    %c0_23 = arith.constant 0 : index
    %c0_24 = arith.constant 0 : index
    %43 = vector.load %arg9[%c0_23, %c0_24] : memref<1x128xf32, #tpu.memory_space<vmem>>, vector<1x128xf32>
    %cst_25 = arith.constant dense<0.000000e+00> : vector<8xf32>
    %44 = vector.multi_reduction <add>, %41, %cst_25 [1] : vector<8x128xf32> to vector<8xf32>
    %45 = vector.shape_cast %44 : vector<8xf32> to vector<8x1xf32>
    %cst_26 = arith.constant 3.125000e-02 : f32
    %46 = vector.broadcast %cst_26 : f32 to vector<8x1xf32>
    %47 = arith.mulf %45, %46 : vector<8x1xf32>
    %48 = arith.mulf %41, %41 : vector<8x128xf32>
    %cst_27 = arith.constant dense<0.000000e+00> : vector<8xf32>
    %49 = vector.multi_reduction <add>, %48, %cst_27 [1] : vector<8x128xf32> to vector<8xf32>
    %50 = vector.shape_cast %49 : vector<8xf32> to vector<8x1xf32>
    %cst_28 = arith.constant 3.125000e-02 : f32
    %51 = vector.broadcast %cst_28 : f32 to vector<8x1xf32>
    %52 = arith.mulf %50, %51 : vector<8x1xf32>
    %53 = arith.mulf %47, %47 : vector<8x1xf32>
    %54 = arith.subf %52, %53 : vector<8x1xf32>
    %cst_29 = arith.constant 0.000000e+00 : f32
    %55 = vector.broadcast %cst_29 : f32 to vector<8x1xf32>
    %56 = arith.maximumf %54, %55 : vector<8x1xf32>
    %cst_30 = arith.constant 9.99999974E-6 : f32
    %57 = vector.broadcast %cst_30 : f32 to vector<8x1xf32>
    %58 = arith.addf %56, %57 : vector<8x1xf32>
    %59 = math.rsqrt %58 : vector<8x1xf32>
    %60 = vector.broadcast %47 : vector<8x1xf32> to vector<8x128xf32>
    %61 = arith.subf %41, %60 : vector<8x128xf32>
    %62 = vector.broadcast %59 : vector<8x1xf32> to vector<8x128xf32>
    %63 = arith.mulf %61, %62 : vector<8x128xf32>
    %64 = vector.broadcast %42 : vector<1x128xf32> to vector<8x128xf32>
    %65 = arith.mulf %63, %64 : vector<8x128xf32>
    %66 = vector.broadcast %43 : vector<1x128xf32> to vector<8x128xf32>
    %67 = arith.addf %65, %66 : vector<8x128xf32>
    %cst_31 = arith.constant 0.00999999977 : f32
    %68 = vector.broadcast %cst_31 : f32 to vector<8x128xf32>
    %69 = arith.mulf %68, %67 : vector<8x128xf32>
    %70 = arith.maximumf %67, %69 : vector<8x128xf32>
    %71 = arith.addf %70, %35 : vector<8x128xf32>
    %72 = arith.truncf %71 : vector<8x128xf32> to vector<8x128xbf16>
    %c0_32 = arith.constant 0 : index
    %c0_33 = arith.constant 0 : index
    %73 = vector.load %arg10[%c0_32, %c0_33] : memref<128x128xbf16, #tpu.memory_space<vmem>>, vector<128x128xbf16>
    %cst_34 = arith.constant dense<0.000000e+00> : vector<8x128xf32>
    %74 = tpu.matmul %72, %73, %cst_34 {dimension_numbers = #tpu.dot_dimension_numbers<[1], [0], [0], [1], [0, 0, 1, 1], [], []>} : vector<8x128xbf16>, vector<128x128xbf16>, vector<8x128xf32> -> vector<8x128xf32>
    %c0_35 = arith.constant 0 : index
    %c0_36 = arith.constant 0 : index
    %75 = vector.load %arg11[%c0_35, %c0_36] : memref<1x128xf32, #tpu.memory_space<vmem>>, vector<1x128xf32>
    %76 = vector.broadcast %75 : vector<1x128xf32> to vector<8x128xf32>
    %77 = arith.addf %74, %76 : vector<8x128xf32>
    %cst_37 = arith.constant 0.00999999977 : f32
    %78 = vector.broadcast %cst_37 : f32 to vector<8x128xf32>
    %79 = arith.mulf %78, %77 : vector<8x128xf32>
    %80 = arith.maximumf %77, %79 : vector<8x128xf32>
    %81 = math.tanh %80 : vector<8x128xf32>
    %cst_38 = arith.constant 1.000000e+06 : f32
    %82 = vector.broadcast %cst_38 : f32 to vector<8x128xf32>
    %83 = arith.mulf %81, %82 : vector<8x128xf32>
    %84 = vector.extract_strided_slice %83 {offsets = [0, 0], sizes = [8, 8], strides = [1, 1]} : vector<8x128xf32> to vector<8x8xf32>
    %c0_39 = arith.constant 0 : index
    %c0_40 = arith.constant 0 : index
    %85 = vector.load %arg12[%c0_39, %c0_40] : memref<8x8xf32, #tpu.memory_space<vmem>>, vector<8x8xf32>
    tpu.vector_store %arg12[%c0_39, %c0_40], %84 {strides = array<i32>} : memref<8x8xf32, #tpu.memory_space<vmem>>, vector<8x8xf32>,
    return
  }
  func.func @transform_0(%arg0: i32) -> (i32, i32) {
    %c0_i32 = arith.constant 0 : i32
    %c0_i32_0 = arith.constant 0 : i32
    return %arg0, %c0_i32 : i32, i32
  }
  func.func @transform_1(%arg0: i32) -> (i32, i32) {
    %c0_i32 = arith.constant 0 : i32
    %c0_i32_0 = arith.constant 0 : i32
    %c0_i32_1 = arith.constant 0 : i32
    return %c0_i32, %c0_i32_0 : i32, i32
  }
  func.func @transform_2(%arg0: i32) -> (i32, i32) {
    %c0_i32 = arith.constant 0 : i32
    %c0_i32_0 = arith.constant 0 : i32
    %c0_i32_1 = arith.constant 0 : i32
    return %c0_i32, %c0_i32_0 : i32, i32
  }
  func.func @transform_3(%arg0: i32) -> (i32, i32) {
    %c0_i32 = arith.constant 0 : i32
    %c0_i32_0 = arith.constant 0 : i32
    %c0_i32_1 = arith.constant 0 : i32
    return %c0_i32, %c0_i32_0 : i32, i32
  }
  func.func @transform_4(%arg0: i32) -> (i32, i32) {
    %c0_i32 = arith.constant 0 : i32
    %c0_i32_0 = arith.constant 0 : i32
    %c0_i32_1 = arith.constant 0 : i32
    return %c0_i32, %c0_i32_0 : i32, i32
  }
  func.func @transform_5(%arg0: i32) -> (i32, i32) {
    %c0_i32 = arith.constant 0 : i32
    %c0_i32_0 = arith.constant 0 : i32
    %c0_i32_1 = arith.constant 0 : i32
    return %c0_i32, %c0_i32_0 : i32, i32
  }
  func.func @transform_6(%arg0: i32) -> (i32, i32) {
    %c0_i32 = arith.constant 0 : i32
    %c0_i32_0 = arith.constant 0 : i32
    %c0_i32_1 = arith.constant 0 : i32
    return %c0_i32, %c0_i32_0 : i32, i32
  }
  func.func @transform_7(%arg0: i32) -> (i32, i32) {
    %c0_i32 = arith.constant 0 : i32
    %c0_i32_0 = arith.constant 0 : i32
    %c0_i32_1 = arith.constant 0 : i32
    return %c0_i32, %c0_i32_0 : i32, i32
  }
  func.func @transform_8(%arg0: i32) -> (i32, i32) {
    %c0_i32 = arith.constant 0 : i32
    %c0_i32_0 = arith.constant 0 : i32
    %c0_i32_1 = arith.constant 0 : i32
    return %c0_i32, %c0_i32_0 : i32, i32
  }
  func.func @transform_9(%arg0: i32) -> (i32, i32) {
    %c0_i32 = arith.constant 0 : i32
    %c0_i32_0 = arith.constant 0 : i32
    %c0_i32_1 = arith.constant 0 : i32
    return %c0_i32, %c0_i32_0 : i32, i32
  }
  func.func @transform_10(%arg0: i32) -> (i32, i32) {
    %c0_i32 = arith.constant 0 : i32
    %c0_i32_0 = arith.constant 0 : i32
    %c0_i32_1 = arith.constant 0 : i32
    return %c0_i32, %c0_i32_0 : i32, i32
  }
  func.func @transform_11(%arg0: i32) -> (i32, i32) {
    %c0_i32 = arith.constant 0 : i32
    %c0_i32_0 = arith.constant 0 : i32
    return %arg0, %c0_i32 : i32, i32
  }
}

module attributes {stable_mosaic.version = 11 : i64} {
  func.func @kernel(%arg0: i32, %arg1: memref<8x32xf32, #tpu.memory_space<vmem>>, %arg2: memref<32x128xbf16, #tpu.memory_space<vmem>>, %arg3: memref<1x128xf32, #tpu.memory_space<vmem>>, %arg4: memref<1x128xf32, #tpu.memory_space<vmem>>, %arg5: memref<1x128xf32, #tpu.memory_space<vmem>>, %arg6: memref<128x128xbf16, #tpu.memory_space<vmem>>, %arg7: memref<1x128xf32, #tpu.memory_space<vmem>>, %arg8: memref<1x128xf32, #tpu.memory_space<vmem>>, %arg9: memref<1x128xf32, #tpu.memory_space<vmem>>, %arg10: memref<128x128xbf16, #tpu.memory_space<vmem>>, %arg11: memref<1x128xf32, #tpu.memory_space<vmem>>, %arg12: memref<8x8xf32, #tpu.memory_space<vmem>>) attributes {dimension_semantics = [#tpu.dimension_semantics<parallel>], iteration_bounds = array<i64: 1>, scalar_prefetch = 0 : i64, scratch_operands = 0 : i64, tpu.core_type = #tpu.core_type<tc>, window_params = [{transform_indices = @transform_0, window_bounds = array<i64: 8, 32>}, {pipeline_mode = #tpu.pipeline_mode<synchronous>, transform_indices = @transform_1, window_bounds = array<i64: 32, 128>}, {pipeline_mode = #tpu.pipeline_mode<synchronous>, transform_indices = @transform_2, window_bounds = array<i64: 1, 128>}, {pipeline_mode = #tpu.pipeline_mode<synchronous>, transform_indices = @transform_3, window_bounds = array<i64: 1, 128>}, {pipeline_mode = #tpu.pipeline_mode<synchronous>, transform_indices = @transform_4, window_bounds = array<i64: 1, 128>}, {pipeline_mode = #tpu.pipeline_mode<synchronous>, transform_indices = @transform_5, window_bounds = array<i64: 128, 128>}, {pipeline_mode = #tpu.pipeline_mode<synchronous>, transform_indices = @transform_6, window_bounds = array<i64: 1, 128>}, {pipeline_mode = #tpu.pipeline_mode<synchronous>, transform_indices = @transform_7, window_bounds = array<i64: 1, 128>}, {pipeline_mode = #tpu.pipeline_mode<synchronous>, transform_indices = @transform_8, window_bounds = array<i64: 1, 128>}, {pipeline_mode = #tpu.pipeline_mode<synchronous>, transform_indices = @transform_9, window_bounds = array<i64: 128, 128>}, {pipeline_mode = #tpu.pipeline_mode<synchronous>, transform_indices = @transform_10, window_bounds = array<i64: 1, 128>}, {transform_indices = @transform_11, window_bounds = array<i64: 8, 8>}]} {
    %c0 = arith.constant 0 : index
    %c0_0 = arith.constant 0 : index
    %0 = vector.load %arg1[%c0, %c0_0] : memref<8x32xf32, #tpu.memory_space<vmem>>, vector<8x32xf32>
    %1 = arith.truncf %0 : vector<8x32xf32> to vector<8x32xbf16>
    %c0_1 = arith.constant 0 : index
    %c0_2 = arith.constant 0 : index
    %2 = vector.load %arg2[%c0_1, %c0_2] : memref<32x128xbf16, #tpu.memory_space<vmem>>, vector<32x128xbf16>
    %cst = arith.constant dense<0.000000e+00> : vector<8x128xf32>
    %3 = tpu.matmul %1, %2, %cst {dimension_numbers = #tpu.dot_dimension_numbers<[1], [0], [0], [1], [0, 0, 1, 1], [], []>} : vector<8x32xbf16>, vector<32x128xbf16>, vector<8x128xf32> -> vector<8x128xf32>
    %c0_3 = arith.constant 0 : index
    %c0_4 = arith.constant 0 : index
    %4 = vector.load %arg3[%c0_3, %c0_4] : memref<1x128xf32, #tpu.memory_space<vmem>>, vector<1x128xf32>
    %5 = vector.broadcast %4 : vector<1x128xf32> to vector<8x128xf32>
    %6 = arith.addf %3, %5 : vector<8x128xf32>
    %c0_5 = arith.constant 0 : index
    %c0_6 = arith.constant 0 : index
    %7 = vector.load %arg4[%c0_5, %c0_6] : memref<1x128xf32, #tpu.memory_space<vmem>>, vector<1x128xf32>
    %c0_7 = arith.constant 0 : index
    %c0_8 = arith.constant 0 : index
    %8 = vector.load %arg5[%c0_7, %c0_8] : memref<1x128xf32, #tpu.memory_space<vmem>>, vector<1x128xf32>
    %cst_9 = arith.constant dense<0.000000e+00> : vector<8xf32>
    %9 = vector.multi_reduction <add>, %6, %cst_9 [1] : vector<8x128xf32> to vector<8xf32>
    %10 = vector.shape_cast %9 : vector<8xf32> to vector<8x1xf32>
    %cst_10 = arith.constant 3.125000e-02 : f32
    %11 = vector.broadcast %cst_10 : f32 to vector<8x1xf32>
    %12 = arith.mulf %10, %11 : vector<8x1xf32>
    %13 = arith.mulf %6, %6 : vector<8x128xf32>
    %cst_11 = arith.constant dense<0.000000e+00> : vector<8xf32>
    %14 = vector.multi_reduction <add>, %13, %cst_11 [1] : vector<8x128xf32> to vector<8xf32>
    %15 = vector.shape_cast %14 : vector<8xf32> to vector<8x1xf32>
    %cst_12 = arith.constant 3.125000e-02 : f32
    %16 = vector.broadcast %cst_12 : f32 to vector<8x1xf32>
    %17 = arith.mulf %15, %16 : vector<8x1xf32>
    %18 = arith.mulf %12, %12 : vector<8x1xf32>
    %19 = arith.subf %17, %18 : vector<8x1xf32>
    %cst_13 = arith.constant 0.000000e+00 : f32
    %20 = vector.broadcast %cst_13 : f32 to vector<8x1xf32>
    %21 = arith.maximumf %19, %20 : vector<8x1xf32>
    %cst_14 = arith.constant 9.99999974E-6 : f32
    %22 = vector.broadcast %cst_14 : f32 to vector<8x1xf32>
    %23 = arith.addf %21, %22 : vector<8x1xf32>
    %24 = math.rsqrt %23 : vector<8x1xf32>
    %25 = vector.broadcast %12 : vector<8x1xf32> to vector<8x128xf32>
    %26 = arith.subf %6, %25 : vector<8x128xf32>
    %27 = vector.broadcast %24 : vector<8x1xf32> to vector<8x128xf32>
    %28 = arith.mulf %26, %27 : vector<8x128xf32>
    %29 = vector.broadcast %7 : vector<1x128xf32> to vector<8x128xf32>
    %30 = arith.mulf %28, %29 : vector<8x128xf32>
    %31 = vector.broadcast %8 : vector<1x128xf32> to vector<8x128xf32>
    %32 = arith.addf %30, %31 : vector<8x128xf32>
    %cst_15 = arith.constant 0.00999999977 : f32
    %33 = vector.broadcast %cst_15 : f32 to vector<8x128xf32>
    %34 = arith.mulf %33, %32 : vector<8x128xf32>
    %35 = arith.maximumf %32, %34 : vector<8x128xf32>
    %36 = arith.truncf %35 : vector<8x128xf32> to vector<8x128xbf16>
    %c0_16 = arith.constant 0 : index
    %c0_17 = arith.constant 0 : index
    %37 = vector.load %arg6[%c0_16, %c0_17] : memref<128x128xbf16, #tpu.memory_space<vmem>>, vector<128x128xbf16>
    %cst_18 = arith.constant dense<0.000000e+00> : vector<8x128xf32>
    %38 = tpu.matmul %36, %37, %cst_18 {dimension_numbers = #tpu.dot_dimension_numbers<[1], [0], [0], [1], [0, 0, 1, 1], [], []>} : vector<8x128xbf16>, vector<128x128xbf16>, vector<8x128xf32> -> vector<8x128xf32>
    %c0_19 = arith.constant 0 : index
    %c0_20 = arith.constant 0 : index
    %39 = vector.load %arg7[%c0_19, %c0_20] : memref<1x128xf32, #tpu.memory_space<vmem>>, vector<1x128xf32>
    %40 = vector.broadcast %39 : vector<1x128xf32> to vector<8x128xf32>
    %41 = arith.addf %38, %40 : vector<8x128xf32>
    %c0_21 = arith.constant 0 : index
    %c0_22 = arith.constant 0 : index
    %42 = vector.load %arg8[%c0_21, %c0_22] : memref<1x128xf32, #tpu.memory_space<vmem>>, vector<1x128xf32>
    %c0_23 = arith.constant 0 : index
    %c0_24 = arith.constant 0 : index
    %43 = vector.load %arg9[%c0_23, %c0_24] : memref<1x128xf32, #tpu.memory_space<vmem>>, vector<1x128xf32>
    %cst_25 = arith.constant dense<0.000000e+00> : vector<8xf32>
    %44 = vector.multi_reduction <add>, %41, %cst_25 [1] : vector<8x128xf32> to vector<8xf32>
    %45 = vector.shape_cast %44 : vector<8xf32> to vector<8x1xf32>
    %cst_26 = arith.constant 3.125000e-02 : f32
    %46 = vector.broadcast %cst_26 : f32 to vector<8x1xf32>
    %47 = arith.mulf %45, %46 : vector<8x1xf32>
    %48 = arith.mulf %41, %41 : vector<8x128xf32>
    %cst_27 = arith.constant dense<0.000000e+00> : vector<8xf32>
    %49 = vector.multi_reduction <add>, %48, %cst_27 [1] : vector<8x128xf32> to vector<8xf32>
    %50 = vector.shape_cast %49 : vector<8xf32> to vector<8x1xf32>
    %cst_28 = arith.constant 3.125000e-02 : f32
    %51 = vector.broadcast %cst_28 : f32 to vector<8x1xf32>
    %52 = arith.mulf %50, %51 : vector<8x1xf32>
    %53 = arith.mulf %47, %47 : vector<8x1xf32>
    %54 = arith.subf %52, %53 : vector<8x1xf32>
    %cst_29 = arith.constant 0.000000e+00 : f32
    %55 = vector.broadcast %cst_29 : f32 to vector<8x1xf32>
    %56 = arith.maximumf %54, %55 : vector<8x1xf32>
    %cst_30 = arith.constant 9.99999974E-6 : f32
    %57 = vector.broadcast %cst_30 : f32 to vector<8x1xf32>
    %58 = arith.addf %56, %57 : vector<8x1xf32>
    %59 = math.rsqrt %58 : vector<8x1xf32>
    %60 = vector.broadcast %47 : vector<8x1xf32> to vector<8x128xf32>
    %61 = arith.subf %41, %60 : vector<8x128xf32>
    %62 = vector.broadcast %59 : vector<8x1xf32> to vector<8x128xf32>
    %63 = arith.mulf %61, %62 : vector<8x128xf32>
    %64 = vector.broadcast %42 : vector<1x128xf32> to vector<8x128xf32>
    %65 = arith.mulf %63, %64 : vector<8x128xf32>
    %66 = vector.broadcast %43 : vector<1x128xf32> to vector<8x128xf32>
    %67 = arith.addf %65, %66 : vector<8x128xf32>
    %cst_31 = arith.constant 0.00999999977 : f32
    %68 = vector.broadcast %cst_31 : f32 to vector<8x128xf32>
    %69 = arith.mulf %68, %67 : vector<8x128xf32>
    %70 = arith.maximumf %67, %69 : vector<8x128xf32>
    %71 = arith.addf %70, %35 : vector<8x128xf32>
    %72 = arith.truncf %71 : vector<8x128xf32> to vector<8x128xbf16>
    %c0_32 = arith.constant 0 : index
    %c0_33 = arith.constant 0 : index
    %73 = vector.load %arg10[%c0_32, %c0_33] : memref<128x128xbf16, #tpu.memory_space<vmem>>, vector<128x128xbf16>
    %cst_34 = arith.constant dense<0.000000e+00> : vector<8x128xf32>
    %74 = tpu.matmul %72, %73, %cst_34 {dimension_numbers = #tpu.dot_dimension_numbers<[1], [0], [0], [1], [0, 0, 1, 1], [], []>} : vector<8x128xbf16>, vector<128x128xbf16>, vector<8x128xf32> -> vector<8x128xf32>
    %c0_35 = arith.constant 0 : index
    %c0_36 = arith.constant 0 : index
    %75 = vector.load %arg11[%c0_35, %c0_36] : memref<1x128xf32, #tpu.memory_space<vmem>>, vector<1x128xf32>
    %76 = vector.broadcast %75 : vector<1x128xf32> to vector<8x128xf32>
    %77 = arith.addf %74, %76 : vector<8x128xf32>
    %cst_37 = arith.constant 0.00999999977 : f32
    %78 = vector.broadcast %cst_37 : f32 to vector<8x128xf32>
    %79 = arith.mulf %78, %77 : vector<8x128xf32>
    %80 = arith.maximumf %77, %79 : vector<8x128xf32>
    %81 = math.tanh %80 : vector<8x128xf32>
    %cst_38 = arith.constant 1.000000e+06 : f32
    %82 = vector.broadcast %cst_38 : f32 to vector<8x128xf32>
    %83 = arith.mulf %81, %82 : vector<8x128xf32>
    %84 = vector.extract_strided_slice %83 {offsets = [0, 0], sizes = [8, 8], strides = [1, 1]} : vector<8x128xf32> to vector<8x8xf32>
    %c0_39 = arith.constant 0 : index
    %c0_40 = arith.constant 0 : index
    %85 = vector.load %arg12[%c0_39, %c0_40] : memref<8x8xf32, #tpu.memory_space<vmem>>, vector<8x8xf32>
    tpu.vector_store %arg12[%c0_39, %c0_40], %84 {strides = array<i32>} : memref<8x8xf32, #tpu.memory_space<vmem>>, vector<8x8xf32>,
    return
  }
  func.func @transform_0(%arg0: i32) -> (i32, i32) {
    %c0_i32 = arith.constant 0 : i32
    %c0_i32_0 = arith.constant 0 : i32
    return %arg0, %c0_i32 : i32, i32
  }
  func.func @transform_1(%arg0: i32) -> (i32, i32) {
    %c0_i32 = arith.constant 0 : i32
    %c0_i32_0 = arith.constant 0 : i32
    %c0_i32_1 = arith.constant 0 : i32
    return %c0_i32, %c0_i32_0 : i32, i32
  }
  func.func @transform_2(%arg0: i32) -> (i32, i32) {
    %c0_i32 = arith.constant 0 : i32
    %c0_i32_0 = arith.constant 0 : i32
    %c0_i32_1 = arith.constant 0 : i32
    return %c0_i32, %c0_i32_0 : i32, i32
  }
  func.func @transform_3(%arg0: i32) -> (i32, i32) {
    %c0_i32 = arith.constant 0 : i32
    %c0_i32_0 = arith.constant 0 : i32
    %c0_i32_1 = arith.constant 0 : i32
    return %c0_i32, %c0_i32_0 : i32, i32
  }
  func.func @transform_4(%arg0: i32) -> (i32, i32) {
    %c0_i32 = arith.constant 0 : i32
    %c0_i32_0 = arith.constant 0 : i32
    %c0_i32_1 = arith.constant 0 : i32
    return %c0_i32, %c0_i32_0 : i32, i32
  }
  func.func @transform_5(%arg0: i32) -> (i32, i32) {
    %c0_i32 = arith.constant 0 : i32
    %c0_i32_0 = arith.constant 0 : i32
    %c0_i32_1 = arith.constant 0 : i32
    return %c0_i32, %c0_i32_0 : i32, i32
  }
  func.func @transform_6(%arg0: i32) -> (i32, i32) {
    %c0_i32 = arith.constant 0 : i32
    %c0_i32_0 = arith.constant 0 : i32
    %c0_i32_1 = arith.constant 0 : i32
    return %c0_i32, %c0_i32_0 : i32, i32
  }
  func.func @transform_7(%arg0: i32) -> (i32, i32) {
    %c0_i32 = arith.constant 0 : i32
    %c0_i32_0 = arith.constant 0 : i32
    %c0_i32_1 = arith.constant 0 : i32
    return %c0_i32, %c0_i32_0 : i32, i32
  }
  func.func @transform_8(%arg0: i32) -> (i32, i32) {
    %c0_i32 = arith.constant 0 : i32
    %c0_i32_0 = arith.constant 0 : i32
    %c0_i32_1 = arith.constant 0 : i32
    return %c0_i32, %c0_i32_0 : i32, i32
  }
  func.func @transform_9(%arg0: i32) -> (i32, i32) {
    %c0_i32 = arith.constant 0 : i32
    %c0_i32_0 = arith.constant 0 : i32
    %c0_i32_1 = arith.constant 0 : i32
    return %c0_i32, %c0_i32_0 : i32, i32
  }
  func.func @transform_10(%arg0: i32) -> (i32, i32) {
    %c0_i32 = arith.constant 0 : i32
    %c0_i32_0 = arith.constant 0 : i32
    %c0_i32_1 = arith.constant 0 : i32
    return %c0_i32, %c0_i32_0 : i32, i32
  }
  func.func @transform_11(%arg0: i32) -> (i32, i32) {
    %c0_i32 = arith.constant 0 : i32
    %c0_i32_0 = arith.constant 0 : i32
    return %arg0, %c0_i32 : i32, i32
  }
}

</mosaic_0001>

<llo_original>
// kernel: _forward.1
$region0: #{_forward.1}
  #allocation0 [shape = 'u32[]', space=smem, size = 0x4, offset = 0x4, fixed_abs, tag = 'smem constant byte address 0x4 - core index']
  #allocation1 [shape = 'u32[72,128]{1,0:T(1,128)}', space=vmem, size = 0x9000, scoped, tag = 'internal scratch']
  %s0 = inlined_call_operand.hbm [shape: f32[8,32], index: 0, kind: input, shape index: {}]
  %s1 = inlined_call_operand.hbm [shape: bf16[32,128], index: 1, kind: input, shape index: {}]
  %s2 = inlined_call_operand.vmem [shape: f32[1,128], index: 2, kind: input, shape index: {}]
  %s3 = inlined_call_operand.vmem [shape: f32[1,128], index: 3, kind: input, shape index: {}]
  %s4 = inlined_call_operand.vmem [shape: f32[1,128], index: 4, kind: input, shape index: {}]
  %s5 = inlined_call_operand.hbm [shape: bf16[128,128], index: 5, kind: input, shape index: {}]
  %s6 = inlined_call_operand.vmem [shape: f32[1,128], index: 6, kind: input, shape index: {}]
  %s7 = inlined_call_operand.vmem [shape: f32[1,128], index: 7, kind: input, shape index: {}]
  %s8 = inlined_call_operand.vmem [shape: f32[1,128], index: 8, kind: input, shape index: {}]
  %s9 = inlined_call_operand.hbm [shape: bf16[128,128], index: 9, kind: input, shape index: {}]
  %s10 = inlined_call_operand.vmem [shape: f32[1,128], index: 10, kind: input, shape index: {}]
  %s11 = inlined_call_operand.hbm [shape: f32[8,8], index: 11, kind: output, shape index: {}]
  %s12 = sld [smem:[#allocation0]]
  $region70: #{_forward.1} parent=0
    _
  %s14 = ssub.s32 1, %s12
  %s15 = scalar_select 0, %s14, %s12
  $region1: #{_forward.1} parent=0
    #allocation2 [shape = 'u8[4096]{0}', space=vmem, size = 0x1000, scoped, tag = 'input window, operand 0, single buffered']
    #allocation3 [shape = 's32[1]{0}', space=sflag, size = 0x4, scoped, tag = 'scoped memory for _forward.1']
    #allocation4 [shape = 's32[1]{0}', space=sflag, size = 0x4, scoped, tag = 'scoped memory for _forward.1']
    #allocation5 [shape = 'u8[8192]{0}', space=vmem, size = 0x2000, scoped, tag = 'input window, operand 1, single buffered']
    #allocation6 [shape = 's32[1]{0}', space=sflag, size = 0x4, scoped, tag = 'scoped memory for _forward.1']
    #allocation7 [shape = 'u8[32768]{0}', space=vmem, size = 0x8000, scoped, tag = 'input window, operand 5, single buffered']
    #allocation8 [shape = 'u8[32768]{0}', space=vmem, size = 0x8000, scoped, tag = 'input window, operand 9, single buffered']
    #allocation9 [shape = 's32[1]{0}', space=sflag, size = 0x4, scoped, tag = 'scoped memory for _forward.1']
    #allocation10 [shape = 'u8[4096]{0}', space=vmem, size = 0x1000, scoped, tag = 'output window, operand 0, single buffered']
    %16 = vsyncpa [#allocation3], 0
    %17 = vsyncpa [#allocation6], 0
    %18 = vsyncpa [#allocation9], 0
    %19 = vsyncpa [#allocation4], 0
    // Predicated region
    $region2: #{_forward.1} parent=1 // pred_check
      _
    $region3: #{_forward.1} parent=1 // pred_check_branch
      %21 = sbr.rel (0) target = $region5
    $region4: #{_forward.1} parent=1 // pred_region
      %23 = vsyncadd [#allocation3], 0
      %s25 = sshll.u32 %s0, 4
      %s26 = int_to_ptr.hbm [resolvable:$true] %s25
      %s27 = sshll.u32 [#allocation2], 4
      %s28 = int_to_ptr.vmem [resolvable:$true] %s27
      %30 = dma.hbm_to_vmem [thread:$0]  %s26, 128, %s28, [#allocation3]
    $region5: #{_forward.1} parent=1 // pred_fallthru
      _
    // Predicated region
    $region6: #{_forward.1} parent=1 // pred_check
      _
    $region7: #{_forward.1} parent=1 // pred_check_branch
      %32 = sbr.rel (0) target = $region9
    $region8: #{_forward.1} parent=1 // pred_region
      %34 = vsyncadd [#allocation6], 0
      %s35 = sshll.u32 %s1, 4
      %s36 = int_to_ptr.hbm [resolvable:$true] %s35
      %s37 = sshll.u32 [#allocation5], 4
      %s38 = int_to_ptr.vmem [resolvable:$true] %s37
      %43 = dma.hbm_to_vmem [thread:$0]  %s36, 256, %s38, [#allocation6], 64, 64, 4
    $region9: #{_forward.1} parent=1 // pred_fallthru
      _
    // Predicated region
    $region10: #{_forward.1} parent=1 // pred_check
      _
    $region11: #{_forward.1} parent=1 // pred_check_branch
      %45 = sbr.rel (0) target = $region13
    $region12: #{_forward.1} parent=1 // pred_region
      _
    $region13: #{_forward.1} parent=1 // pred_fallthru
      _
    // Predicated region
    $region14: #{_forward.1} parent=1 // pred_check
      _
    $region15: #{_forward.1} parent=1 // pred_check_branch
      %47 = sbr.rel (0) target = $region17
    $region16: #{_forward.1} parent=1 // pred_region
      _
    $region17: #{_forward.1} parent=1 // pred_fallthru
      _
    // Predicated region
    $region18: #{_forward.1} parent=1 // pred_check
      _
    $region19: #{_forward.1} parent=1 // pred_check_branch
      %49 = sbr.rel (0) target = $region21
    $region20: #{_forward.1} parent=1 // pred_region
      _
    $region21: #{_forward.1} parent=1 // pred_fallthru
      _
    // Predicated region
    $region22: #{_forward.1} parent=1 // pred_check
      _
    $region23: #{_forward.1} parent=1 // pred_check_branch
      %51 = sbr.rel (0) target = $region25
    $region24: #{_forward.1} parent=1 // pred_region
      %53 = vsyncadd [#allocation6], 0
      %s54 = sshll.u32 %s5, 4
      %s55 = int_to_ptr.hbm [resolvable:$true] %s54
      %s56 = sshll.u32 [#allocation7], 4
      %s57 = int_to_ptr.vmem [resolvable:$true] %s56
      %62 = dma.hbm_to_vmem [thread:$0]  %s55, 1024, %s57, [#allocation6], 64, 64, 4
    $region25: #{_forward.1} parent=1 // pred_fallthru
      _
    // Predicated region
    $region26: #{_forward.1} parent=1 // pred_check
      _
    $region27: #{_forward.1} parent=1 // pred_check_branch
      %64 = sbr.rel (0) target = $region29
    $region28: #{_forward.1} parent=1 // pred_region
      _
    $region29: #{_forward.1} parent=1 // pred_fallthru
      _
    // Predicated region
    $region30: #{_forward.1} parent=1 // pred_check
      _
    $region31: #{_forward.1} parent=1 // pred_check_branch
      %66 = sbr.rel (0) target = $region33
    $region32: #{_forward.1} parent=1 // pred_region
      _
    $region33: #{_forward.1} parent=1 // pred_fallthru
      _
    // Predicated region
    $region34: #{_forward.1} parent=1 // pred_check
      _
    $region35: #{_forward.1} parent=1 // pred_check_branch
      %68 = sbr.rel (0) target = $region37
    $region36: #{_forward.1} parent=1 // pred_region
      _
    $region37: #{_forward.1} parent=1 // pred_fallthru
      _
    // Predicated region
    $region38: #{_forward.1} parent=1 // pred_check
      _
    $region39: #{_forward.1} parent=1 // pred_check_branch
      %70 = sbr.rel (0) target = $region41
    $region40: #{_forward.1} parent=1 // pred_region
      %72 = vsyncadd [#allocation9], 0
      %s73 = sshll.u32 %s9, 4
      %s74 = int_to_ptr.hbm [resolvable:$true] %s73
      %s75 = sshll.u32 [#allocation8], 4
      %s76 = int_to_ptr.vmem [resolvable:$true] %s75
      %81 = dma.hbm_to_vmem [thread:$0]  %s74, 1024, %s76, [#allocation9], 64, 64, 4
    $region41: #{_forward.1} parent=1 // pred_fallthru
      _
    // Predicated region
    $region42: #{_forward.1} parent=1 // pred_check
      _
    $region43: #{_forward.1} parent=1 // pred_check_branch
      %83 = sbr.rel (0) target = $region45
    $region44: #{_forward.1} parent=1 // pred_region
      _
    $region45: #{_forward.1} parent=1 // pred_fallthru
      _
    // Predicated region
    $region46: #{_forward.1} parent=1 // pred_check
      _
    $region47: #{_forward.1} parent=1 // pred_check_branch
      %85 = sbr.rel (0) target = $region49
    $region48: #{_forward.1} parent=1 // pred_region
      %87 = dma.done [#allocation3], 128
    $region49: #{_forward.1} parent=1 // pred_fallthru
      _
    // Predicated region
    $region50: #{_forward.1} parent=1 // pred_check
      _
    $region51: #{_forward.1} parent=1 // pred_check_branch
      %89 = sbr.rel (0) target = $region53
    $region52: #{_forward.1} parent=1 // pred_region
      %91 = dma.done [#allocation6], 256
    $region53: #{_forward.1} parent=1 // pred_fallthru
      _
    // Predicated region
    $region54: #{_forward.1} parent=1 // pred_check
      _
    $region55: #{_forward.1} parent=1 // pred_check_branch
      %93 = sbr.rel (0) target = $region57
    $region56: #{_forward.1} parent=1 // pred_region
      %95 = dma.done [#allocation6], 1024
    $region57: #{_forward.1} parent=1 // pred_fallthru
      _
    // Predicated region
    $region58: #{_forward.1} parent=1 // pred_check
      _
    $region59: #{_forward.1} parent=1 // pred_check_branch
      %97 = sbr.rel (0) target = $region61
    $region60: #{_forward.1} parent=1 // pred_region
      %99 = dma.done [#allocation9], 1024
    $region61: #{_forward.1} parent=1 // pred_fallthru
      _
    %v101 = vld [vmem:[#allocation2] sm:$0xff]
    %v102 = vpack.c.bf16 %v101, %v101
    %v103 = vld [vmem:[#allocation5] sm:$0xf]
    %v104 = vld [vmem:[#allocation5 + $0x4] sm:$0xf]
    %v105 = vld [vmem:[#allocation5 + $0x8] sm:$0xf]
    %v106 = vld [vmem:[#allocation5 + $0xc] sm:$0xf]
    %v107 = vld [vmem:[%s2] sm:$0x1]
    %v109 = vperm.slane %v107, 0
    %v115 = vunpack.c.l.b16 %v103
    %v116 = vunpack.c.l.b16 %v104
    %v117 = vunpack.c.l.b16 %v105
    %v118 = vunpack.c.l.b16 %v106
    %v119 = vpack.c.b16 %v116, %v115
    %v120 = vpack.c.b16 %v118, %v117
    %vm123 = vcmask 261120
    %v125 = vsel %vm123, %v102, 0
    %127 = vmatpush.bf16.msra.mxu0 0
    %128 = vmatpush.bf16.msra.mxu0 0
    %129 = vmatpush.bf16.msra.mxu0 0
    %130 = vmatpush.bf16.msra.mxu0 0
    %131 = vmatpush.bf16.msra.mxu0 0
    %132 = vmatpush.bf16.msra.mxu0 0
    %133 = vmatpush.bf16.msra.mxu0 %v120
    %134 = vmatpush.bf16.msra.mxu0 %v119
    %135 = vmatmul.bf16.gmra.mxu0 %v125
    %v136 = vpop.f32.mrf.mxu0
    %v137 = vadd.f32 %v109, %v136
    %v138 = vpop.f32.mrf.mxu0
    %139 = vdwg.mxu0
    %v140 = vld [vmem:[%s3] sm:$0x1]
    %v141 = vld [vmem:[%s4] sm:$0x1]
    %142 = vadd.xlane.f32.xlu0 %v137
    %v143 = vpop.xlane.xlu0 %142
    %v144 = vmul.f32 %v143, 0.03125
    %v145 = vmul.f32 %v137, %v137
    %146 = vadd.xlane.f32.xlu0 %v145
    %v147 = vpop.xlane.xlu0 %146
    %v148 = vmul.f32 %v147, 0.03125
    %v149 = vmul.f32 %v144, %v144
    %v150 = vsub.f32 %v148, %v149
    %v151 = vmax.f32 %v150, 0.0
    %v152 = vadd.f32 %v151, 1e-05
    %v153 = vrsqrt.pop %v152
    %v154 = vmul.f32 %v153, %v152
    %v155 = vmul.f32 %v154, %v153
    %v156 = vmul.f32 0.5, %v155
    %v157 = vsub.f32 1.5, %v156
    %v158 = vmul.f32 %v153, %v157
    %vm159 = vweird.f32 %v152
    %vm160 = vweird.f32 %v153
    %vm161 = vmor %vm159, %vm160
    %v162 = vsel %vm161, %v153, %v158
    %v163 = vsub.f32 %v137, %v144
    %v164 = vmul.f32 %v163, %v162
    %v166 = vperm.slane %v140, 0
    %v168 = vmul.f32 %v164, %v166
    %v170 = vperm.slane %v141, 0
    %v172 = vadd.f32 %v168, %v170
    %v173 = vmul.f32 %v172, 0.01
    %v174 = vmax.f32 %v172, %v173
    %v175 = vpack.c.bf16 %v174, %v174
    %v176 = vld [vmem:[#allocation7] sm:$0xf]
    %v177 = vld [vmem:[#allocation7 + $0x4] sm:$0xf]
    %v178 = vld [vmem:[#allocation7 + $0x8] sm:$0xf]
    %v179 = vld [vmem:[#allocation7 + $0xc] sm:$0xf]
    %v180 = vld [vmem:[#allocation7 + $0x10] sm:$0xf]
    %v181 = vld [vmem:[#allocation7 + $0x14] sm:$0xf]
    %v182 = vld [vmem:[#allocation7 + $0x18] sm:$0xf]
    %v183 = vld [vmem:[#allocation7 + $0x1c] sm:$0xf]
    %v184 = vld [vmem:[#allocation7 + $0x20] sm:$0xf]
    %v185 = vld [vmem:[#allocation7 + $0x24] sm:$0xf]
    %v186 = vld [vmem:[#allocation7 + $0x28] sm:$0xf]
    %v187 = vld [vmem:[#allocation7 + $0x2c] sm:$0xf]
    %v188 = vld [vmem:[#allocation7 + $0x30] sm:$0xf]
    %v189 = vld [vmem:[#allocation7 + $0x34] sm:$0xf]
    %v190 = vld [vmem:[#allocation7 + $0x38] sm:$0xf]
    %v191 = vld [vmem:[#allocation7 + $0x3c] sm:$0xf]
    %v192 = vld [vmem:[%s6] sm:$0x1]
    %v194 = vperm.slane %v192, 0
    %v212 = vunpack.c.l.b16 %v176
    %v213 = vunpack.c.l.b16 %v177
    %v214 = vunpack.c.l.b16 %v178
    %v215 = vunpack.c.l.b16 %v179
    %v216 = vunpack.c.l.b16 %v180
    %v217 = vunpack.c.l.b16 %v181
    %v218 = vunpack.c.l.b16 %v182
    %v219 = vunpack.c.l.b16 %v183
    %v220 = vunpack.c.l.b16 %v184
    %v221 = vunpack.c.l.b16 %v185
    %v222 = vunpack.c.l.b16 %v186
    %v223 = vunpack.c.l.b16 %v187
    %v224 = vunpack.c.l.b16 %v188
    %v225 = vunpack.c.l.b16 %v189
    %v226 = vunpack.c.l.b16 %v190
    %v227 = vunpack.c.l.b16 %v191
    %v228 = vpack.c.b16 %v213, %v212
    %v229 = vpack.c.b16 %v215, %v214
    %v230 = vpack.c.b16 %v217, %v216
    %v231 = vpack.c.b16 %v219, %v218
    %v232 = vpack.c.b16 %v221, %v220
    %v233 = vpack.c.b16 %v223, %v222
    %v234 = vpack.c.b16 %v225, %v224
    %v235 = vpack.c.b16 %v227, %v226
    %244 = vmatpush.bf16.msra.mxu0 %v235
    %245 = vmatpush.bf16.msra.mxu0 %v234
    %246 = vmatpush.bf16.msra.mxu0 %v233
    %247 = vmatpush.bf16.msra.mxu0 %v232
    %248 = vmatpush.bf16.msra.mxu0 %v231
    %249 = vmatpush.bf16.msra.mxu0 %v230
    %250 = vmatpush.bf16.msra.mxu0 %v229
    %251 = vmatpush.bf16.msra.mxu0 %v228
    %252 = vmatmul.bf16.gmra.mxu0 %v175
    %v253 = vpop.f32.mrf.mxu0
    %v254 = vadd.f32 %v194, %v253
    %v255 = vpop.f32.mrf.mxu0
    %256 = vdwg.mxu0
    %v257 = vld [vmem:[%s7] sm:$0x1]
    %v258 = vld [vmem:[%s8] sm:$0x1]
    %259 = vadd.xlane.f32.xlu0 %v254
    %v260 = vpop.xlane.xlu0 %259
    %v261 = vmul.f32 %v260, 0.03125
    %v262 = vmul.f32 %v254, %v254
    %263 = vadd.xlane.f32.xlu0 %v262
    %v264 = vpop.xlane.xlu0 %263
    %v265 = vmul.f32 %v264, 0.03125
    %v266 = vmul.f32 %v261, %v261
    %v267 = vsub.f32 %v265, %v266
    %v268 = vmax.f32 %v267, 0.0
    %v269 = vadd.f32 %v268, 1e-05
    %v270 = vrsqrt.pop %v269
    %v271 = vmul.f32 %v270, %v269
    %v272 = vmul.f32 %v271, %v270
    %v273 = vmul.f32 0.5, %v272
    %v274 = vsub.f32 1.5, %v273
    %v275 = vmul.f32 %v270, %v274
    %vm276 = vweird.f32 %v269
    %vm277 = vweird.f32 %v270
    %vm278 = vmor %vm276, %vm277
    %v279 = vsel %vm278, %v270, %v275
    %v280 = vsub.f32 %v254, %v261
    %v281 = vmul.f32 %v280, %v279
    %v283 = vperm.slane %v257, 0
    %v285 = vmul.f32 %v281, %v283
    %v287 = vperm.slane %v258, 0
    %v289 = vadd.f32 %v285, %v287
    %v290 = vmul.f32 %v289, 0.01
    %v291 = vmax.f32 %v289, %v290
    %v292 = vadd.f32 %v291, %v174
    %v293 = vpack.c.bf16 %v292, %v292
    %v294 = vld [vmem:[#allocation8] sm:$0xf]
    %v295 = vld [vmem:[#allocation8 + $0x4] sm:$0xf]
    %v296 = vld [vmem:[#allocation8 + $0x8] sm:$0xf]
    %v297 = vld [vmem:[#allocation8 + $0xc] sm:$0xf]
    %v298 = vld [vmem:[#allocation8 + $0x10] sm:$0xf]
    %v299 = vld [vmem:[#allocation8 + $0x14] sm:$0xf]
    %v300 = vld [vmem:[#allocation8 + $0x18] sm:$0xf]
    %v301 = vld [vmem:[#allocation8 + $0x1c] sm:$0xf]
    %v302 = vld [vmem:[#allocation8 + $0x20] sm:$0xf]
    %v303 = vld [vmem:[#allocation8 + $0x24] sm:$0xf]
    %v304 = vld [vmem:[#allocation8 + $0x28] sm:$0xf]
    %v305 = vld [vmem:[#allocation8 + $0x2c] sm:$0xf]
    %v306 = vld [vmem:[#allocation8 + $0x30] sm:$0xf]
    %v307 = vld [vmem:[#allocation8 + $0x34] sm:$0xf]
    %v308 = vld [vmem:[#allocation8 + $0x38] sm:$0xf]
    %v309 = vld [vmem:[#allocation8 + $0x3c] sm:$0xf]
    %v310 = vld [vmem:[%s10] sm:$0x1]
    %v312 = vperm.slane %v310, 0
    %v330 = vunpack.c.l.b16 %v294
    %v331 = vunpack.c.l.b16 %v295
    %v332 = vunpack.c.l.b16 %v296
    %v333 = vunpack.c.l.b16 %v297
    %v334 = vunpack.c.l.b16 %v298
    %v335 = vunpack.c.l.b16 %v299
    %v336 = vunpack.c.l.b16 %v300
    %v337 = vunpack.c.l.b16 %v301
    %v338 = vunpack.c.l.b16 %v302
    %v339 = vunpack.c.l.b16 %v303
    %v340 = vunpack.c.l.b16 %v304
    %v341 = vunpack.c.l.b16 %v305
    %v342 = vunpack.c.l.b16 %v306
    %v343 = vunpack.c.l.b16 %v307
    %v344 = vunpack.c.l.b16 %v308
    %v345 = vunpack.c.l.b16 %v309
    %v346 = vpack.c.b16 %v331, %v330
    %v347 = vpack.c.b16 %v333, %v332
    %v348 = vpack.c.b16 %v335, %v334
    %v349 = vpack.c.b16 %v337, %v336
    %v350 = vpack.c.b16 %v339, %v338
    %v351 = vpack.c.b16 %v341, %v340
    %v352 = vpack.c.b16 %v343, %v342
    %v353 = vpack.c.b16 %v345, %v344
    %362 = vmatpush.bf16.msra.mxu0 %v353
    %363 = vmatpush.bf16.msra.mxu0 %v352
    %364 = vmatpush.bf16.msra.mxu0 %v351
    %365 = vmatpush.bf16.msra.mxu0 %v350
    %366 = vmatpush.bf16.msra.mxu0 %v349
    %367 = vmatpush.bf16.msra.mxu0 %v348
    %368 = vmatpush.bf16.msra.mxu0 %v347
    %369 = vmatpush.bf16.msra.mxu0 %v346
    %370 = vmatmul.bf16.gmra.mxu0 %v293
    %v371 = vpop.f32.mrf.mxu0
    %v372 = vadd.f32 %v312, %v371
    %v373 = vpop.f32.mrf.mxu0
    %374 = vdwg.mxu0
    %v375 = vmul.f32 %v372, 0.01
    %v376 = vmax.f32 %v372, %v375
    %v377 = vtanh.pop %v376
    %v378 = vmul.f32 %v377, 1000000.0
    %vm379 = vcmask 64512
    %380 = vst.msk [vmem:[#allocation10] sm:$0xff] %vm379, %v378
    // Predicated region
    $region62: #{_forward.1} parent=1 // pred_check
      _
    $region63: #{_forward.1} parent=1 // pred_check_branch
      %382 = sbr.rel (0) target = $region65
    $region64: #{_forward.1} parent=1 // pred_region
      %384 = vsyncadd [#allocation4], 0
      %s386 = sshll.u32 [#allocation10], 4
      %s387 = int_to_ptr.vmem [resolvable:$true] %s386
      %s388 = sshll.u32 %s11, 4
      %s389 = int_to_ptr.hbm [resolvable:$true] %s388
      %391 = dma.vmem_to_hbm [thread:$0]  %s387, 128, %s389, [#allocation4]
    $region65: #{_forward.1} parent=1 // pred_fallthru
      _
    // Predicated region
    $region66: #{_forward.1} parent=1 // pred_check
      _
    $region67: #{_forward.1} parent=1 // pred_check_branch
      %393 = sbr.rel (0) target = $region69
    $region68: #{_forward.1} parent=1 // pred_region
      %395 = dma.done [#allocation4], 128
    $region69: #{_forward.1} parent=1 // pred_fallthru
      _
    %396 = vsyncpa [#allocation3], 1
    %397 = vsyncpa [#allocation6], 1
    %398 = vsyncpa [#allocation9], 1
    %399 = vsyncpa [#allocation4], 1

// kernel: _forward.1
$region0: #{_forward.1}
  #allocation0 [shape = 'u32[]', space=smem, size = 0x4, offset = 0x4, fixed_abs, tag = 'smem constant byte address 0x4 - core index']
  #allocation1 [shape = 'u32[72,128]{1,0:T(1,128)}', space=vmem, size = 0x9000, scoped, tag = 'internal scratch']
  %s0 = inlined_call_operand.hbm [shape: f32[8,32], index: 0, kind: input, shape index: {}]
  %s1 = inlined_call_operand.hbm [shape: bf16[32,128], index: 1, kind: input, shape index: {}]
  %s2 = inlined_call_operand.vmem [shape: f32[1,128], index: 2, kind: input, shape index: {}]
  %s3 = inlined_call_operand.vmem [shape: f32[1,128], index: 3, kind: input, shape index: {}]
  %s4 = inlined_call_operand.vmem [shape: f32[1,128], index: 4, kind: input, shape index: {}]
  %s5 = inlined_call_operand.hbm [shape: bf16[128,128], index: 5, kind: input, shape index: {}]
  %s6 = inlined_call_operand.vmem [shape: f32[1,128], index: 6, kind: input, shape index: {}]
  %s7 = inlined_call_operand.vmem [shape: f32[1,128], index: 7, kind: input, shape index: {}]
  %s8 = inlined_call_operand.vmem [shape: f32[1,128], index: 8, kind: input, shape index: {}]
  %s9 = inlined_call_operand.hbm [shape: bf16[128,128], index: 9, kind: input, shape index: {}]
  %s10 = inlined_call_operand.vmem [shape: f32[1,128], index: 10, kind: input, shape index: {}]
  %s11 = inlined_call_operand.hbm [shape: f32[8,8], index: 11, kind: output, shape index: {}]
  %s12 = sld [smem:[#allocation0]]
  $region70: #{_forward.1} parent=0
    _
  %s14 = ssub.s32 1, %s12
  %s15 = scalar_select 0, %s14, %s12
  $region1: #{_forward.1} parent=0
    #allocation2 [shape = 'u8[4096]{0}', space=vmem, size = 0x1000, scoped, tag = 'input window, operand 0, single buffered']
    #allocation3 [shape = 's32[1]{0}', space=sflag, size = 0x4, scoped, tag = 'scoped memory for _forward.1']
    #allocation4 [shape = 's32[1]{0}', space=sflag, size = 0x4, scoped, tag = 'scoped memory for _forward.1']
    #allocation5 [shape = 'u8[8192]{0}', space=vmem, size = 0x2000, scoped, tag = 'input window, operand 1, single buffered']
    #allocation6 [shape = 's32[1]{0}', space=sflag, size = 0x4, scoped, tag = 'scoped memory for _forward.1']
    #allocation7 [shape = 'u8[32768]{0}', space=vmem, size = 0x8000, scoped, tag = 'input window, operand 5, single buffered']
    #allocation8 [shape = 'u8[32768]{0}', space=vmem, size = 0x8000, scoped, tag = 'input window, operand 9, single buffered']
    #allocation9 [shape = 's32[1]{0}', space=sflag, size = 0x4, scoped, tag = 'scoped memory for _forward.1']
    #allocation10 [shape = 'u8[4096]{0}', space=vmem, size = 0x1000, scoped, tag = 'output window, operand 0, single buffered']
    %16 = vsyncpa [#allocation3], 0
    %17 = vsyncpa [#allocation6], 0
    %18 = vsyncpa [#allocation9], 0
    %19 = vsyncpa [#allocation4], 0
    // Predicated region
    $region2: #{_forward.1} parent=1 // pred_check
      _
    $region3: #{_forward.1} parent=1 // pred_check_branch
      %21 = sbr.rel (0) target = $region5
    $region4: #{_forward.1} parent=1 // pred_region
      %23 = vsyncadd [#allocation3], 0
      %s25 = sshll.u32 %s0, 4
      %s26 = int_to_ptr.hbm [resolvable:$true] %s25
      %s27 = sshll.u32 [#allocation2], 4
      %s28 = int_to_ptr.vmem [resolvable:$true] %s27
      %30 = dma.hbm_to_vmem [thread:$0]  %s26, 128, %s28, [#allocation3]
    $region5: #{_forward.1} parent=1 // pred_fallthru
      _
    // Predicated region
    $region6: #{_forward.1} parent=1 // pred_check
      _
    $region7: #{_forward.1} parent=1 // pred_check_branch
      %32 = sbr.rel (0) target = $region9
    $region8: #{_forward.1} parent=1 // pred_region
      %34 = vsyncadd [#allocation6], 0
      %s35 = sshll.u32 %s1, 4
      %s36 = int_to_ptr.hbm [resolvable:$true] %s35
      %s37 = sshll.u32 [#allocation5], 4
      %s38 = int_to_ptr.vmem [resolvable:$true] %s37
      %43 = dma.hbm_to_vmem [thread:$0]  %s36, 256, %s38, [#allocation6], 64, 64, 4
    $region9: #{_forward.1} parent=1 // pred_fallthru
      _
    // Predicated region
    $region10: #{_forward.1} parent=1 // pred_check
      _
    $region11: #{_forward.1} parent=1 // pred_check_branch
      %45 = sbr.rel (0) target = $region13
    $region12: #{_forward.1} parent=1 // pred_region
      _
    $region13: #{_forward.1} parent=1 // pred_fallthru
      _
    // Predicated region
    $region14: #{_forward.1} parent=1 // pred_check
      _
    $region15: #{_forward.1} parent=1 // pred_check_branch
      %47 = sbr.rel (0) target = $region17
    $region16: #{_forward.1} parent=1 // pred_region
      _
    $region17: #{_forward.1} parent=1 // pred_fallthru
      _
    // Predicated region
    $region18: #{_forward.1} parent=1 // pred_check
      _
    $region19: #{_forward.1} parent=1 // pred_check_branch
      %49 = sbr.rel (0) target = $region21
    $region20: #{_forward.1} parent=1 // pred_region
      _
    $region21: #{_forward.1} parent=1 // pred_fallthru
      _
    // Predicated region
    $region22: #{_forward.1} parent=1 // pred_check
      _
    $region23: #{_forward.1} parent=1 // pred_check_branch
      %51 = sbr.rel (0) target = $region25
    $region24: #{_forward.1} parent=1 // pred_region
      %53 = vsyncadd [#allocation6], 0
      %s54 = sshll.u32 %s5, 4
      %s55 = int_to_ptr.hbm [resolvable:$true] %s54
      %s56 = sshll.u32 [#allocation7], 4
      %s57 = int_to_ptr.vmem [resolvable:$true] %s56
      %62 = dma.hbm_to_vmem [thread:$0]  %s55, 1024, %s57, [#allocation6], 64, 64, 4
    $region25: #{_forward.1} parent=1 // pred_fallthru
      _
    // Predicated region
    $region26: #{_forward.1} parent=1 // pred_check
      _
    $region27: #{_forward.1} parent=1 // pred_check_branch
      %64 = sbr.rel (0) target = $region29
    $region28: #{_forward.1} parent=1 // pred_region
      _
    $region29: #{_forward.1} parent=1 // pred_fallthru
      _
    // Predicated region
    $region30: #{_forward.1} parent=1 // pred_check
      _
    $region31: #{_forward.1} parent=1 // pred_check_branch
      %66 = sbr.rel (0) target = $region33
    $region32: #{_forward.1} parent=1 // pred_region
      _
    $region33: #{_forward.1} parent=1 // pred_fallthru
      _
    // Predicated region
    $region34: #{_forward.1} parent=1 // pred_check
      _
    $region35: #{_forward.1} parent=1 // pred_check_branch
      %68 = sbr.rel (0) target = $region37
    $region36: #{_forward.1} parent=1 // pred_region
      _
    $region37: #{_forward.1} parent=1 // pred_fallthru
      _
    // Predicated region
    $region38: #{_forward.1} parent=1 // pred_check
      _
    $region39: #{_forward.1} parent=1 // pred_check_branch
      %70 = sbr.rel (0) target = $region41
    $region40: #{_forward.1} parent=1 // pred_region
      %72 = vsyncadd [#allocation9], 0
      %s73 = sshll.u32 %s9, 4
      %s74 = int_to_ptr.hbm [resolvable:$true] %s73
      %s75 = sshll.u32 [#allocation8], 4
      %s76 = int_to_ptr.vmem [resolvable:$true] %s75
      %81 = dma.hbm_to_vmem [thread:$0]  %s74, 1024, %s76, [#allocation9], 64, 64, 4
    $region41: #{_forward.1} parent=1 // pred_fallthru
      _
    // Predicated region
    $region42: #{_forward.1} parent=1 // pred_check
      _
    $region43: #{_forward.1} parent=1 // pred_check_branch
      %83 = sbr.rel (0) target = $region45
    $region44: #{_forward.1} parent=1 // pred_region
      _
    $region45: #{_forward.1} parent=1 // pred_fallthru
      _
    // Predicated region
    $region46: #{_forward.1} parent=1 // pred_check
      _
    $region47: #{_forward.1} parent=1 // pred_check_branch
      %85 = sbr.rel (0) target = $region49
    $region48: #{_forward.1} parent=1 // pred_region
      %87 = dma.done [#allocation3], 128
    $region49: #{_forward.1} parent=1 // pred_fallthru
      _
    // Predicated region
    $region50: #{_forward.1} parent=1 // pred_check
      _
    $region51: #{_forward.1} parent=1 // pred_check_branch
      %89 = sbr.rel (0) target = $region53
    $region52: #{_forward.1} parent=1 // pred_region
      %91 = dma.done [#allocation6], 256
    $region53: #{_forward.1} parent=1 // pred_fallthru
      _
    // Predicated region
    $region54: #{_forward.1} parent=1 // pred_check
      _
    $region55: #{_forward.1} parent=1 // pred_check_branch
      %93 = sbr.rel (0) target = $region57
    $region56: #{_forward.1} parent=1 // pred_region
      %95 = dma.done [#allocation6], 1024
    $region57: #{_forward.1} parent=1 // pred_fallthru
      _
    // Predicated region
    $region58: #{_forward.1} parent=1 // pred_check
      _
    $region59: #{_forward.1} parent=1 // pred_check_branch
      %97 = sbr.rel (0) target = $region61
    $region60: #{_forward.1} parent=1 // pred_region
      %99 = dma.done [#allocation9], 1024
    $region61: #{_forward.1} parent=1 // pred_fallthru
      _
    %v101 = vld [vmem:[#allocation2] sm:$0xff]
    %v102 = vpack.c.bf16 %v101, %v101
    %v103 = vld [vmem:[#allocation5] sm:$0xf]
    %v104 = vld [vmem:[#allocation5 + $0x4] sm:$0xf]
    %v105 = vld [vmem:[#allocation5 + $0x8] sm:$0xf]
    %v106 = vld [vmem:[#allocation5 + $0xc] sm:$0xf]
    %v107 = vld [vmem:[%s2] sm:$0x1]
    %v109 = vperm.slane %v107, 0
    %v115 = vunpack.c.l.b16 %v103
    %v116 = vunpack.c.l.b16 %v104
    %v117 = vunpack.c.l.b16 %v105
    %v118 = vunpack.c.l.b16 %v106
    %v119 = vpack.c.b16 %v116, %v115
    %v120 = vpack.c.b16 %v118, %v117
    %vm123 = vcmask 261120
    %v125 = vsel %vm123, %v102, 0
    %127 = vmatpush.bf16.msra.mxu0 0
    %128 = vmatpush.bf16.msra.mxu0 0
    %129 = vmatpush.bf16.msra.mxu0 0
    %130 = vmatpush.bf16.msra.mxu0 0
    %131 = vmatpush.bf16.msra.mxu0 0
    %132 = vmatpush.bf16.msra.mxu0 0
    %133 = vmatpush.bf16.msra.mxu0 %v120
    %134 = vmatpush.bf16.msra.mxu0 %v119
    %135 = vmatmul.bf16.gmra.mxu0 %v125
    %v136 = vpop.f32.mrf.mxu0
    %v137 = vadd.f32 %v109, %v136
    %v138 = vpop.f32.mrf.mxu0
    %139 = vdwg.mxu0
    %v140 = vld [vmem:[%s3] sm:$0x1]
    %v141 = vld [vmem:[%s4] sm:$0x1]
    %142 = vadd.xlane.f32.xlu0 %v137
    %v143 = vpop.xlane.xlu0 %142
    %v144 = vmul.f32 %v143, 0.03125
    %v145 = vmul.f32 %v137, %v137
    %146 = vadd.xlane.f32.xlu0 %v145
    %v147 = vpop.xlane.xlu0 %146
    %v148 = vmul.f32 %v147, 0.03125
    %v149 = vmul.f32 %v144, %v144
    %v150 = vsub.f32 %v148, %v149
    %v151 = vmax.f32 %v150, 0.0
    %v152 = vadd.f32 %v151, 1e-05
    %v153 = vrsqrt.pop %v152
    %v154 = vmul.f32 %v153, %v152
    %v155 = vmul.f32 %v154, %v153
    %v156 = vmul.f32 0.5, %v155
    %v157 = vsub.f32 1.5, %v156
    %v158 = vmul.f32 %v153, %v157
    %vm159 = vweird.f32 %v152
    %vm160 = vweird.f32 %v153
    %vm161 = vmor %vm159, %vm160
    %v162 = vsel %vm161, %v153, %v158
    %v163 = vsub.f32 %v137, %v144
    %v164 = vmul.f32 %v163, %v162
    %v166 = vperm.slane %v140, 0
    %v168 = vmul.f32 %v164, %v166
    %v170 = vperm.slane %v141, 0
    %v172 = vadd.f32 %v168, %v170
    %v173 = vmul.f32 %v172, 0.01
    %v174 = vmax.f32 %v172, %v173
    %v175 = vpack.c.bf16 %v174, %v174
    %v176 = vld [vmem:[#allocation7] sm:$0xf]
    %v177 = vld [vmem:[#allocation7 + $0x4] sm:$0xf]
    %v178 = vld [vmem:[#allocation7 + $0x8] sm:$0xf]
    %v179 = vld [vmem:[#allocation7 + $0xc] sm:$0xf]
    %v180 = vld [vmem:[#allocation7 + $0x10] sm:$0xf]
    %v181 = vld [vmem:[#allocation7 + $0x14] sm:$0xf]
    %v182 = vld [vmem:[#allocation7 + $0x18] sm:$0xf]
    %v183 = vld [vmem:[#allocation7 + $0x1c] sm:$0xf]
    %v184 = vld [vmem:[#allocation7 + $0x20] sm:$0xf]
    %v185 = vld [vmem:[#allocation7 + $0x24] sm:$0xf]
    %v186 = vld [vmem:[#allocation7 + $0x28] sm:$0xf]
    %v187 = vld [vmem:[#allocation7 + $0x2c] sm:$0xf]
    %v188 = vld [vmem:[#allocation7 + $0x30] sm:$0xf]
    %v189 = vld [vmem:[#allocation7 + $0x34] sm:$0xf]
    %v190 = vld [vmem:[#allocation7 + $0x38] sm:$0xf]
    %v191 = vld [vmem:[#allocation7 + $0x3c] sm:$0xf]
    %v192 = vld [vmem:[%s6] sm:$0x1]
    %v194 = vperm.slane %v192, 0
    %v212 = vunpack.c.l.b16 %v176
    %v213 = vunpack.c.l.b16 %v177
    %v214 = vunpack.c.l.b16 %v178
    %v215 = vunpack.c.l.b16 %v179
    %v216 = vunpack.c.l.b16 %v180
    %v217 = vunpack.c.l.b16 %v181
    %v218 = vunpack.c.l.b16 %v182
    %v219 = vunpack.c.l.b16 %v183
    %v220 = vunpack.c.l.b16 %v184
    %v221 = vunpack.c.l.b16 %v185
    %v222 = vunpack.c.l.b16 %v186
    %v223 = vunpack.c.l.b16 %v187
    %v224 = vunpack.c.l.b16 %v188
    %v225 = vunpack.c.l.b16 %v189
    %v226 = vunpack.c.l.b16 %v190
    %v227 = vunpack.c.l.b16 %v191
    %v228 = vpack.c.b16 %v213, %v212
    %v229 = vpack.c.b16 %v215, %v214
    %v230 = vpack.c.b16 %v217, %v216
    %v231 = vpack.c.b16 %v219, %v218
    %v232 = vpack.c.b16 %v221, %v220
    %v233 = vpack.c.b16 %v223, %v222
    %v234 = vpack.c.b16 %v225, %v224
    %v235 = vpack.c.b16 %v227, %v226
    %244 = vmatpush.bf16.msra.mxu0 %v235
    %245 = vmatpush.bf16.msra.mxu0 %v234
    %246 = vmatpush.bf16.msra.mxu0 %v233
    %247 = vmatpush.bf16.msra.mxu0 %v232
    %248 = vmatpush.bf16.msra.mxu0 %v231
    %249 = vmatpush.bf16.msra.mxu0 %v230
    %250 = vmatpush.bf16.msra.mxu0 %v229
    %251 = vmatpush.bf16.msra.mxu0 %v228
    %252 = vmatmul.bf16.gmra.mxu0 %v175
    %v253 = vpop.f32.mrf.mxu0
    %v254 = vadd.f32 %v194, %v253
    %v255 = vpop.f32.mrf.mxu0
    %256 = vdwg.mxu0
    %v257 = vld [vmem:[%s7] sm:$0x1]
    %v258 = vld [vmem:[%s8] sm:$0x1]
    %259 = vadd.xlane.f32.xlu0 %v254
    %v260 = vpop.xlane.xlu0 %259
    %v261 = vmul.f32 %v260, 0.03125
    %v262 = vmul.f32 %v254, %v254
    %263 = vadd.xlane.f32.xlu0 %v262
    %v264 = vpop.xlane.xlu0 %263
    %v265 = vmul.f32 %v264, 0.03125
    %v266 = vmul.f32 %v261, %v261
    %v267 = vsub.f32 %v265, %v266
    %v268 = vmax.f32 %v267, 0.0
    %v269 = vadd.f32 %v268, 1e-05
    %v270 = vrsqrt.pop %v269
    %v271 = vmul.f32 %v270, %v269
    %v272 = vmul.f32 %v271, %v270
    %v273 = vmul.f32 0.5, %v272
    %v274 = vsub.f32 1.5, %v273
    %v275 = vmul.f32 %v270, %v274
    %vm276 = vweird.f32 %v269
    %vm277 = vweird.f32 %v270
    %vm278 = vmor %vm276, %vm277
    %v279 = vsel %vm278, %v270, %v275
    %v280 = vsub.f32 %v254, %v261
    %v281 = vmul.f32 %v280, %v279
    %v283 = vperm.slane %v257, 0
    %v285 = vmul.f32 %v281, %v283
    %v287 = vperm.slane %v258, 0
    %v289 = vadd.f32 %v285, %v287
    %v290 = vmul.f32 %v289, 0.01
    %v291 = vmax.f32 %v289, %v290
    %v292 = vadd.f32 %v291, %v174
    %v293 = vpack.c.bf16 %v292, %v292
    %v294 = vld [vmem:[#allocation8] sm:$0xf]
    %v295 = vld [vmem:[#allocation8 + $0x4] sm:$0xf]
    %v296 = vld [vmem:[#allocation8 + $0x8] sm:$0xf]
    %v297 = vld [vmem:[#allocation8 + $0xc] sm:$0xf]
    %v298 = vld [vmem:[#allocation8 + $0x10] sm:$0xf]
    %v299 = vld [vmem:[#allocation8 + $0x14] sm:$0xf]
    %v300 = vld [vmem:[#allocation8 + $0x18] sm:$0xf]
    %v301 = vld [vmem:[#allocation8 + $0x1c] sm:$0xf]
    %v302 = vld [vmem:[#allocation8 + $0x20] sm:$0xf]
    %v303 = vld [vmem:[#allocation8 + $0x24] sm:$0xf]
    %v304 = vld [vmem:[#allocation8 + $0x28] sm:$0xf]
    %v305 = vld [vmem:[#allocation8 + $0x2c] sm:$0xf]
    %v306 = vld [vmem:[#allocation8 + $0x30] sm:$0xf]
    %v307 = vld [vmem:[#allocation8 + $0x34] sm:$0xf]
    %v308 = vld [vmem:[#allocation8 + $0x38] sm:$0xf]
    %v309 = vld [vmem:[#allocation8 + $0x3c] sm:$0xf]
    %v310 = vld [vmem:[%s10] sm:$0x1]
    %v312 = vperm.slane %v310, 0
    %v330 = vunpack.c.l.b16 %v294
    %v331 = vunpack.c.l.b16 %v295
    %v332 = vunpack.c.l.b16 %v296
    %v333 = vunpack.c.l.b16 %v297
    %v334 = vunpack.c.l.b16 %v298
    %v335 = vunpack.c.l.b16 %v299
    %v336 = vunpack.c.l.b16 %v300
    %v337 = vunpack.c.l.b16 %v301
    %v338 = vunpack.c.l.b16 %v302
    %v339 = vunpack.c.l.b16 %v303
    %v340 = vunpack.c.l.b16 %v304
    %v341 = vunpack.c.l.b16 %v305
    %v342 = vunpack.c.l.b16 %v306
    %v343 = vunpack.c.l.b16 %v307
    %v344 = vunpack.c.l.b16 %v308
    %v345 = vunpack.c.l.b16 %v309
    %v346 = vpack.c.b16 %v331, %v330
    %v347 = vpack.c.b16 %v333, %v332
    %v348 = vpack.c.b16 %v335, %v334
    %v349 = vpack.c.b16 %v337, %v336
    %v350 = vpack.c.b16 %v339, %v338
    %v351 = vpack.c.b16 %v341, %v340
    %v352 = vpack.c.b16 %v343, %v342
    %v353 = vpack.c.b16 %v345, %v344
    %362 = vmatpush.bf16.msra.mxu0 %v353
    %363 = vmatpush.bf16.msra.mxu0 %v352
    %364 = vmatpush.bf16.msra.mxu0 %v351
    %365 = vmatpush.bf16.msra.mxu0 %v350
    %366 = vmatpush.bf16.msra.mxu0 %v349
    %367 = vmatpush.bf16.msra.mxu0 %v348
    %368 = vmatpush.bf16.msra.mxu0 %v347
    %369 = vmatpush.bf16.msra.mxu0 %v346
    %370 = vmatmul.bf16.gmra.mxu0 %v293
    %v371 = vpop.f32.mrf.mxu0
    %v372 = vadd.f32 %v312, %v371
    %v373 = vpop.f32.mrf.mxu0
    %374 = vdwg.mxu0
    %v375 = vmul.f32 %v372, 0.01
    %v376 = vmax.f32 %v372, %v375
    %v377 = vtanh.pop %v376
    %v378 = vmul.f32 %v377, 1000000.0
    %vm379 = vcmask 64512
    %380 = vst.msk [vmem:[#allocation10] sm:$0xff] %vm379, %v378
    // Predicated region
    $region62: #{_forward.1} parent=1 // pred_check
      _
    $region63: #{_forward.1} parent=1 // pred_check_branch
      %382 = sbr.rel (0) target = $region65
    $region64: #{_forward.1} parent=1 // pred_region
      %384 = vsyncadd [#allocation4], 0
      %s386 = sshll.u32 [#allocation10], 4
      %s387 = int_to_ptr.vmem [resolvable:$true] %s386
      %s388 = sshll.u32 %s11, 4
      %s389 = int_to_ptr.hbm [resolvable:$true] %s388
      %391 = dma.vmem_to_hbm [thread:$0]  %s387, 128, %s389, [#allocation4]
    $region65: #{_forward.1} parent=1 // pred_fallthru
      _
    // Predicated region
    $region66: #{_forward.1} parent=1 // pred_check
      _
    $region67: #{_forward.1} parent=1 // pred_check_branch
      %393 = sbr.rel (0) target = $region69
    $region68: #{_forward.1} parent=1 // pred_region
      %395 = dma.done [#allocation4], 128
    $region69: #{_forward.1} parent=1 // pred_fallthru
      _
    %396 = vsyncpa [#allocation3], 1
    %397 = vsyncpa [#allocation6], 1
    %398 = vsyncpa [#allocation9], 1
    %399 = vsyncpa [#allocation4], 1

</llo_original>
